<compile_context>
chip_gen: v5e
topology: v5e:2x2
jax: 0.10.0
libtpu: 0.0.40
codegen_flags: <defaults>
</compile_context>

<pallas_src>
import jax
import jax.numpy as jnp
from jax.experimental import pallas as pl
from jax.experimental.pallas import tpu as pltpu


def amlp_kernel(x_ref, w_ref, b_ref, out_ref):
    # x_ref  : (1, B, 3F) bf16  -- one instance per grid step (streamed)
    # w_ref  : (3F, 9F)   bf16  -- VMEM-resident across the whole grid
    # b_ref  : (1, 9F)    f32   -- VMEM-resident
    # out_ref: (1, B, F)  f32
    F = out_ref.shape[2]
    F2 = 2 * F

    # Single MXU push per instance: (B, 3F) @ (3F, 9F) -> (B, 9F), f32 accum.
    y = jnp.dot(x_ref[0], w_ref[...],
                preferred_element_type=jnp.float32) + b_ref[...]

    # Column layout (see fuse_amlp_params):
    #   [0, 3F)  : pooled projections  p1 | p2 | p3   (leading lane tiles)
    #   [3F, 9F) : un-pooled projections f1 | f2 | f3 (only needed for norms)
    pooled = y[:, :3 * F]
    proj = y[:, 3 * F:]

    # Global L2 norms: one sublane reduce over B, then three lane-segment sums.
    colsum = jnp.sum(proj * proj, axis=0, keepdims=True)                  # (1, 6F)
    n1 = jnp.sqrt(jnp.sum(colsum[:, 0:F2], axis=1, keepdims=True))        # (1, 1)
    n2 = jnp.sqrt(jnp.sum(colsum[:, F2:2 * F2], axis=1, keepdims=True))
    n3 = jnp.sqrt(jnp.sum(colsum[:, 2 * F2:3 * F2], axis=1, keepdims=True))
    inv_denom = pl.reciprocal(n1 + n2 + n3, approx=False)   # EUP slot, exact

    # Pooling is linear -> combine the already-pooled projections directly.
    p1 = pooled[:, 0:F]
    p2 = pooled[:, F:2 * F]
    p3 = pooled[:, 2 * F:3 * F]
    z = (n1 * inv_denom) * p1 + (n2 * inv_denom) * p2 + (n3 * inv_denom) * p3
    # dropout(p=0.1): eval-mode identity
    # TODO(synk): training-mode dropout mask via pltpu.prng_seed/prng_random_bits.

    # F.normalize(z, p=2, dim=1, eps=1e-12) == z * rsqrt(max(sum(z^2), 1e-24))
    sumsq = jnp.sum(z * z, axis=1, keepdims=True)
    out_ref[0] = z * jax.lax.rsqrt(jnp.maximum(sumsq, 1e-24))


def init_amlp_params(key, feat_size):
    """Deterministic nn.Linear-style init for the three projections."""
    keys = jax.random.split(key, 6)
    bound = 1.0 / jnp.sqrt(feat_size)
    params = {}
    for i, name in enumerate(["i", "q", "v"]):
        params[f"w_{name}"] = jax.random.uniform(
            keys[2 * i], (2 * feat_size, feat_size),
            minval=-bound, maxval=bound, dtype=jnp.float32)
        params[f"b_{name}"] = jax.random.uniform(
            keys[2 * i + 1], (2 * feat_size,),
            minval=-bound, maxval=bound, dtype=jnp.float32)
    return params


def _block_diag(blocks):
    """Simple block-diagonal builder (host-side, runs once)."""
    n = len(blocks)
    rows = []
    for i, blk in enumerate(blocks):
        row = [blk if j == i
               else jnp.zeros((blk.shape[0], blocks[j].shape[1]), blk.dtype)
               for j in range(n)]
        rows.append(jnp.concatenate(row, axis=1))
    return jnp.concatenate(rows, axis=0)


def fuse_amlp_params(params, feat_size):
    """One-time fusion of the three Linear layers + AvgPool1d(2,2)*2 into a
    single (3F, 9F) bf16 weight and (1, 9F) f32 bias.

    Column order: pooled block FIRST ([0,3F): Wi^T P | Wq^T P | Wv^T P), then
    the un-pooled projections ([3F,9F): Wi^T | Wq^T | Wv^T) used only for the
    global norms."""
    F = feat_size
    # Pair-sum pooling matrix (2F, F): P[2j, j] = P[2j+1, j] = 1  (== avgpool*2).
    pool = jnp.repeat(jnp.eye(F, dtype=jnp.float32), 2, axis=0)
    wt = [params[f"w_{n}"].T for n in ("i", "q", "v")]   # each (F, 2F)
    bs = [params[f"b_{n}"] for n in ("i", "q", "v")]     # each (2F,)

    w_pool = _block_diag([w @ pool for w in wt])         # (3F, 3F)
    w_proj = _block_diag(wt)                             # (3F, 6F)
    # TODO(synk): for large F drop the 2/3-zero block-diagonal layout (three
    # (F,2F) matmuls or K/N tiling); at F=32 the zero bytes are noise.
    w_full = jnp.concatenate([w_pool, w_proj], axis=1)   # (3F, 9F)
    b_full = jnp.concatenate([b @ pool for b in bs] + bs).reshape(1, -1)  # (1, 9F)
    return w_full.astype(jnp.bfloat16), b_full.astype(jnp.float32)


@jax.jit
def amlp_forward_stacked(feat1, feat2, feat3, w_full, b_full):
    """feat*: (N, B, F) -- N independent AMLP problem instances.
    One gridded pallas_call: x/out stream per instance, weights stay resident."""
    N, B, F = feat1.shape
    x = jnp.concatenate([feat1, feat2, feat3], axis=-1).astype(jnp.bfloat16)

    return pl.pallas_call(
        amlp_kernel,
        out_shape=jax.ShapeDtypeStruct((N, B, F), jnp.float32),
        grid=(N,),
        in_specs=[
            pl.BlockSpec((1, B, 3 * F), lambda n: (n, 0, 0)),   # streamed x
            pl.BlockSpec((3 * F, 9 * F), lambda n: (0, 0)),     # resident weight
            pl.BlockSpec((1, 9 * F), lambda n: (0, 0)),         # resident bias
        ],
        out_specs=pl.BlockSpec((1, B, F), lambda n: (n, 0, 0)),
        compiler_params=pltpu.CompilerParams(
            # v7x: shard independent instances across both TensorCores.
            dimension_semantics=("parallel",),
            # For large F: raise vmem_limit_bytes (v5e scoped default 16 MiB)
            # and add N-tiling before F ~ 700-800 on v7x (64 MiB VMEM).
        ),
    )(x, w_full, b_full)


def amlp_forward(feat1, feat2, feat3, w_full, b_full):
    """Module-equivalent 2D API: feat* (B, F) -> (B, F)."""
    return amlp_forward_stacked(feat1[None], feat2[None], feat3[None],
                                w_full, b_full)[0]


def amlp_reference(feat1, feat2, feat3, params):
    """Pure-JAX reference mirroring the PyTorch module (single instance)."""
    f1 = feat1 @ params["w_i"].T + params["b_i"]
    f2 = feat2 @ params["w_q"].T + params["b_q"]
    f3 = feat3 @ params["w_v"].T + params["b_v"]
    n1 = jnp.linalg.norm(f1)
    n2 = jnp.linalg.norm(f2)
    n3 = jnp.linalg.norm(f3)
    s = n1 + n2 + n3
    exp_out = (n1 / s) * f1 + (n2 / s) * f2 + (n3 / s) * f3
    B, F2 = exp_out.shape
    z = exp_out.reshape(B, F2 // 2, 2).mean(-1) * 2.0
    norm = jnp.maximum(jnp.linalg.norm(z, axis=1, keepdims=True), 1e-12)
    return z / norm


if __name__ == "__main__":
    feat_size = 32
    batch = 8
    n_instances = 4   # independent problem instances handled by one gridded call

    key = jax.random.PRNGKey(0)
    k_params, k1, k2, k3 = jax.random.split(key, 4)

    params = init_amlp_params(k_params, feat_size)
    w_full, b_full = fuse_amlp_params(params, feat_size)   # one-time host prep

    feat1 = jax.random.normal(k1, (n_instances, batch, feat_size), dtype=jnp.float32)
    feat2 = jax.random.normal(k2, (n_instances, batch, feat_size), dtype=jnp.float32)
    feat3 = jax.random.normal(k3, (n_instances, batch, feat_size), dtype=jnp.float32)

    # Gridded call over N independent instances.
    out = jax.block_until_ready(
        amlp_forward_stacked(feat1, feat2, feat3, w_full, b_full))
    assert out.shape == (n_instances, batch, feat_size)

    ref = jax.vmap(lambda a, b, c: amlp_reference(a, b, c, params))(
        feat1, feat2, feat3)
    max_diff = float(jnp.max(jnp.abs(out - ref)))
    # bf16 weights/activations (f32 accumulation) -> relaxed tolerance.
    assert jnp.allclose(out, ref, atol=2e-2, rtol=2e-2), \
        f"stacked mismatch vs reference: max abs diff {max_diff}"

    # Module-equivalent single-instance (2D) API.
    out2d = jax.block_until_ready(
        amlp_forward(feat1[0], feat2[0], feat3[0], w_full, b_full))
    max_diff2 = float(jnp.max(jnp.abs(out2d - ref[0])))
    assert jnp.allclose(out2d, ref[0], atol=2e-2, rtol=2e-2), \
        f"2D mismatch vs reference: max abs diff {max_diff2}"

    print("KERNEL_OK")
</pallas_src>

<mosaic_0001>
module attributes {stable_mosaic.version = 11 : i64} {
  func.func @amlp_kernel(%arg0: i32, %arg1: memref<1x8x96xbf16, #tpu.memory_space<vmem>>, %arg2: memref<96x288xbf16, #tpu.memory_space<vmem>>, %arg3: memref<1x288xf32, #tpu.memory_space<vmem>>, %arg4: memref<1x8x32xf32, #tpu.memory_space<vmem>>) attributes {dimension_semantics = [#tpu.dimension_semantics<parallel>], iteration_bounds = array<i64: 4>, scalar_prefetch = 0 : i64, scratch_operands = 0 : i64, tpu.core_type = #tpu.core_type<tc>, window_params = [{transform_indices = @transform_0, window_bounds = array<i64: 1, 8, 96>}, {pipeline_mode = #tpu.pipeline_mode<synchronous>, transform_indices = @transform_1, window_bounds = array<i64: 96, 288>}, {pipeline_mode = #tpu.pipeline_mode<synchronous>, transform_indices = @transform_2, window_bounds = array<i64: 1, 288>}, {transform_indices = @transform_3, window_bounds = array<i64: 1, 8, 32>}]} {
    %c0 = arith.constant 0 : index
    %c0_0 = arith.constant 0 : index
    %c0_1 = arith.constant 0 : index
    %0 = vector.load %arg1[%c0, %c0_0, %c0_1] : memref<1x8x96xbf16, #tpu.memory_space<vmem>>, vector<1x8x96xbf16>
    %1 = vector.shape_cast %0 : vector<1x8x96xbf16> to vector<8x96xbf16>
    %c0_2 = arith.constant 0 : index
    %c0_3 = arith.constant 0 : index
    %2 = vector.load %arg2[%c0_2, %c0_3] : memref<96x288xbf16, #tpu.memory_space<vmem>>, vector<96x288xbf16>
    %cst = arith.constant dense<0.000000e+00> : vector<8x288xf32>
    %3 = tpu.matmul %1, %2, %cst {dimension_numbers = #tpu.dot_dimension_numbers<[1], [0], [0], [1], [0, 0, 1, 1], [], []>} : vector<8x96xbf16>, vector<96x288xbf16>, vector<8x288xf32> -> vector<8x288xf32>
    %c0_4 = arith.constant 0 : index
    %c0_5 = arith.constant 0 : index
    %4 = vector.load %arg3[%c0_4, %c0_5] : memref<1x288xf32, #tpu.memory_space<vmem>>, vector<1x288xf32>
    %5 = vector.broadcast %4 : vector<1x288xf32> to vector<8x288xf32>
    %6 = arith.addf %3, %5 : vector<8x288xf32>
    %7 = vector.extract_strided_slice %6 {offsets = [0, 0], sizes = [8, 96], strides = [1, 1]} : vector<8x288xf32> to vector<8x96xf32>
    %8 = vector.extract_strided_slice %6 {offsets = [0, 96], sizes = [8, 192], strides = [1, 1]} : vector<8x288xf32> to vector<8x192xf32>
    %9 = arith.mulf %8, %8 : vector<8x192xf32>
    %cst_6 = arith.constant dense<0.000000e+00> : vector<192xf32>
    %10 = vector.multi_reduction <add>, %9, %cst_6 [0] : vector<8x192xf32> to vector<192xf32>
    %11 = vector.shape_cast %10 : vector<192xf32> to vector<1x192xf32>
    %12 = vector.extract_strided_slice %11 {offsets = [0, 0], sizes = [1, 64], strides = [1, 1]} : vector<1x192xf32> to vector<1x64xf32>
    %cst_7 = arith.constant dense<0.000000e+00> : vector<1xf32>
    %13 = vector.multi_reduction <add>, %12, %cst_7 [1] : vector<1x64xf32> to vector<1xf32>
    %14 = vector.shape_cast %13 : vector<1xf32> to vector<1x1xf32>
    %15 = math.sqrt %14 : vector<1x1xf32>
    %16 = vector.extract_strided_slice %11 {offsets = [0, 64], sizes = [1, 64], strides = [1, 1]} : vector<1x192xf32> to vector<1x64xf32>
    %cst_8 = arith.constant dense<0.000000e+00> : vector<1xf32>
    %17 = vector.multi_reduction <add>, %16, %cst_8 [1] : vector<1x64xf32> to vector<1xf32>
    %18 = vector.shape_cast %17 : vector<1xf32> to vector<1x1xf32>
    %19 = math.sqrt %18 : vector<1x1xf32>
    %20 = vector.extract_strided_slice %11 {offsets = [0, 128], sizes = [1, 64], strides = [1, 1]} : vector<1x192xf32> to vector<1x64xf32>
    %cst_9 = arith.constant dense<0.000000e+00> : vector<1xf32>
    %21 = vector.multi_reduction <add>, %20, %cst_9 [1] : vector<1x64xf32> to vector<1xf32>
    %22 = vector.shape_cast %21 : vector<1xf32> to vector<1x1xf32>
    %23 = math.sqrt %22 : vector<1x1xf32>
    %24 = arith.addf %15, %19 : vector<1x1xf32>
    %25 = arith.addf %24, %23 : vector<1x1xf32>
    %26 = tpu.reciprocal %25 : vector<1x1xf32> -> vector<1x1xf32>
    %27 = vector.extract_strided_slice %7 {offsets = [0, 0], sizes = [8, 32], strides = [1, 1]} : vector<8x96xf32> to vector<8x32xf32>
    %28 = vector.extract_strided_slice %7 {offsets = [0, 32], sizes = [8, 32], strides = [1, 1]} : vector<8x96xf32> to vector<8x32xf32>
    %29 = vector.extract_strided_slice %7 {offsets = [0, 64], sizes = [8, 32], strides = [1, 1]} : vector<8x96xf32> to vector<8x32xf32>
    %30 = arith.mulf %15, %26 : vector<1x1xf32>
    %31 = vector.broadcast %30 : vector<1x1xf32> to vector<8x32xf32>
    %32 = arith.mulf %31, %27 : vector<8x32xf32>
    %33 = arith.mulf %19, %26 : vector<1x1xf32>
    %34 = vector.broadcast %33 : vector<1x1xf32> to vector<8x32xf32>
    %35 = arith.mulf %34, %28 : vector<8x32xf32>
    %36 = arith.addf %32, %35 : vector<8x32xf32>
    %37 = arith.mulf %23, %26 : vector<1x1xf32>
    %38 = vector.broadcast %37 : vector<1x1xf32> to vector<8x32xf32>
    %39 = arith.mulf %38, %29 : vector<8x32xf32>
    %40 = arith.addf %36, %39 : vector<8x32xf32>
    %41 = arith.mulf %40, %40 : vector<8x32xf32>
    %cst_10 = arith.constant dense<0.000000e+00> : vector<8xf32>
    %42 = vector.multi_reduction <add>, %41, %cst_10 [1] : vector<8x32xf32> to vector<8xf32>
    %43 = vector.shape_cast %42 : vector<8xf32> to vector<8x1xf32>
    %cst_11 = arith.constant 1.000000e-24 : f32
    %44 = vector.broadcast %cst_11 : f32 to vector<8x1xf32>
    %45 = arith.maximumf %43, %44 : vector<8x1xf32>
    %46 = math.rsqrt %45 : vector<8x1xf32>
    %47 = vector.broadcast %46 : vector<8x1xf32> to vector<8x32xf32>
    %48 = arith.mulf %40, %47 : vector<8x32xf32>
    %c0_12 = arith.constant 0 : index
    %c0_13 = arith.constant 0 : index
    %c0_14 = arith.constant 0 : index
    %49 = vector.load %arg4[%c0_12, %c0_13, %c0_14] : memref<1x8x32xf32, #tpu.memory_space<vmem>>, vector<1x8x32xf32>
    %50 = vector.shape_cast %49 : vector<1x8x32xf32> to vector<8x32xf32>
    %51 = vector.shape_cast %48 : vector<8x32xf32> to vector<1x8x32xf32>
    tpu.vector_store %arg4[%c0_12, %c0_13, %c0_14], %51 {strides = array<i32>} : memref<1x8x32xf32, #tpu.memory_space<vmem>>, vector<1x8x32xf32>,
    return
  }
  func.func @transform_0(%arg0: i32) -> (i32, i32, i32) {
    %c0_i32 = arith.constant 0 : i32
    %c0_i32_0 = arith.constant 0 : i32
    %c0_i32_1 = arith.constant 0 : i32
    return %arg0, %c0_i32, %c0_i32_0 : i32, i32, i32
  }
  func.func @transform_1(%arg0: i32) -> (i32, i32) {
    %c0_i32 = arith.constant 0 : i32
    %c0_i32_0 = arith.constant 0 : i32
    %c0_i32_1 = arith.constant 0 : i32
    return %c0_i32, %c0_i32_0 : i32, i32
  }
  func.func @transform_2(%arg0: i32) -> (i32, i32) {
    %c0_i32 = arith.constant 0 : i32
    %c0_i32_0 = arith.constant 0 : i32
    %c0_i32_1 = arith.constant 0 : i32
    return %c0_i32, %c0_i32_0 : i32, i32
  }
  func.func @transform_3(%arg0: i32) -> (i32, i32, i32) {
    %c0_i32 = arith.constant 0 : i32
    %c0_i32_0 = arith.constant 0 : i32
    %c0_i32_1 = arith.constant 0 : i32
    return %arg0, %c0_i32, %c0_i32_0 : i32, i32, i32
  }
}

</mosaic_0001>

<llo_original>
// kernel: amlp_forward_stacked.1
$region0: #{amlp_forward_stacked.1}
  #allocation0 [shape = 'u32[]', space=smem, size = 0x4, offset = 0x4, fixed_abs, tag = 'smem constant byte address 0x4 - core index']
  #allocation1 [shape = 'u32[72,128]{1,0:T(1,128)}', space=vmem, size = 0x9000, scoped, tag = 'internal scratch']
  %s0 = inlined_call_operand.vmem [shape: bf16[4,8,96], index: 0, kind: input, shape index: {}]
  %s1 = inlined_call_operand.hbm [shape: bf16[96,288], index: 1, kind: input, shape index: {}]
  %s2 = inlined_call_operand.vmem [shape: f32[1,288], index: 2, kind: input, shape index: {}]
  %s3 = inlined_call_operand.hbm [shape: f32[4,8,32], index: 3, kind: output, shape index: {}]
  %s4 = sld [smem:[#allocation0]]
  $region49: #{amlp_forward_stacked.1} parent=0
    _
  %s6 = ssub.s32 1, %s4
  %s7 = scalar_select 0, %s6, %s4
  $region1: #{amlp_forward_stacked.1} parent=0
    #allocation2 [shape = 'u8[73728]{0}', space=vmem, size = 0x12000, scoped, tag = 'input window, operand 1, single buffered']
    #allocation3 [shape = 's32[2]{0}', space=sflag, size = 0x8, scoped, tag = 'scoped memory for amlp_forward_stacked.1']
    #allocation4 [shape = 's32[2]{0}', space=sflag, size = 0x8, scoped, tag = 'scoped memory for amlp_forward_stacked.1']
    #allocation5 [shape = 'u8[8192]{0}', space=vmem, size = 0x2000, scoped, tag = 'output window, operand 0']
    %8 = vsyncpa [#allocation3], 0
    %9 = vsyncpa [#allocation4], 0
    %s10 = scalar_lea.sflag [#allocation4], 1
    %11 = vsyncpa %s10, 0
    loop: start=0, step=1, limit=6
    $region2: #{amlp_forward_stacked.1} parent=1 // loop_pre_header
      _
    $region3: #{amlp_forward_stacked.1} parent=1 // loop_header
      %s13 = sphi 0, %s17
      %p14 = scmp.ge.s32.totalorder %s13, 6
      %s23 = sphi 0, %s25
      %s26 = sphi 0, %s23
      %s27 = sphi 0, %s26
      %s43 = sphi 0, %s27
      %s47 = sphi 0, %s47
      %s49 = sphi 0, %s47
      %s50 = sphi 0, %s49
      %s64 = sphi 0, %s50
      %s68 = sphi 0, %s68
      %s70 = sphi 0, %s68
      %s71 = sphi 0, %s70
      %s85 = sphi 0, %s71
      %s91 = sphi 0, %s93
      %s94 = sphi 0, %s91
      %s95 = sphi 0, %s94
      %s111 = sphi 0, %s95
    $region4: #{amlp_forward_stacked.1} parent=1 // loop_header_branch
      %16 = sbr.rel (%p14) target = $region8
    $region5: #{amlp_forward_stacked.1} parent=1 // loop_body
      %s18 = ssub.s32 %s13, 1
      %s19 = ssub.s32 %s13, 2
      %s20 = sadd.s32 %s13, 1
      %s21 = ssub.s32 %s13, %s20
      %p22 = scmp.eq.s32.totalorder %s21, 0
      %s24 = sadd.s32 %s23, 1
      %s25 = scalar_select %p22, %s23, %s24
      %p28 = pneg %p22
      %p29 = scmp.eq.s32.totalorder %s13, 3
      %p30 = por %p28, %p29
      %p31 = scmp.ne.s32.totalorder %s23, %s26
      %p32 = scmp.eq.s32.totalorder %s13, 0
      %p33 = por %p31, %p32
      %p34 = scmp.ne.s32.totalorder %s23, %s26
      %p35 = scmp.eq.s32.totalorder %s18, 3
      %p36 = por %p34, %p35
      %p37 = scmp.ne.s32.totalorder %s26, %s27
      %p38 = scmp.eq.s32.totalorder %s18, 0
      %p39 = por %p37, %p38
      %p40 = scmp.ne.s32.totalorder %s26, %s27
      %p41 = scmp.eq.s32.totalorder %s19, 3
      %p42 = por %p40, %p41
      %p44 = scmp.ne.s32.totalorder %s27, %s43
      %p45 = scmp.eq.s32.totalorder %s19, 0
      %p46 = por %p44, %p45
      %s48 = sadd.s32 %s47, 1
      %p51 = scmp.eq.s32.totalorder %s13, 3
      %p52 = scmp.ne.s32.totalorder %s47, %s49
      %p53 = scmp.eq.s32.totalorder %s13, 0
      %p54 = por %p52, %p53
      %p55 = scmp.ne.s32.totalorder %s47, %s49
      %p56 = scmp.eq.s32.totalorder %s18, 3
      %p57 = por %p55, %p56
      %p58 = scmp.ne.s32.totalorder %s49, %s50
      %p59 = scmp.eq.s32.totalorder %s18, 0
      %p60 = por %p58, %p59
      %p61 = scmp.ne.s32.totalorder %s49, %s50
      %p62 = scmp.eq.s32.totalorder %s19, 3
      %p63 = por %p61, %p62
      %p65 = scmp.ne.s32.totalorder %s50, %s64
      %p66 = scmp.eq.s32.totalorder %s19, 0
      %p67 = por %p65, %p66
      %s69 = sadd.s32 %s68, 1
      %p72 = scmp.eq.s32.totalorder %s13, 3
      %p73 = scmp.ne.s32.totalorder %s68, %s70
      %p74 = scmp.eq.s32.totalorder %s13, 0
      %p75 = por %p73, %p74
      %p76 = scmp.ne.s32.totalorder %s68, %s70
      %p77 = scmp.eq.s32.totalorder %s18, 3
      %p78 = por %p76, %p77
      %p79 = scmp.ne.s32.totalorder %s70, %s71
      %p80 = scmp.eq.s32.totalorder %s18, 0
      %p81 = por %p79, %p80
      %p82 = scmp.ne.s32.totalorder %s70, %s71
      %p83 = scmp.eq.s32.totalorder %s19, 3
      %p84 = por %p82, %p83
      %p86 = scmp.ne.s32.totalorder %s71, %s85
      %p87 = scmp.eq.s32.totalorder %s19, 0
      %p88 = por %p86, %p87
      %s89 = ssub.s32 %s13, %s20
      %p90 = scmp.eq.s32.totalorder %s89, 0
      %s92 = sadd.s32 %s91, 1
      %s93 = scalar_select %p90, %s91, %s92
      %p96 = pneg %p90
      %p97 = scmp.eq.s32.totalorder %s13, 3
      %p98 = por %p96, %p97
      %p99 = scmp.ne.s32.totalorder %s91, %s94
      %p100 = scmp.eq.s32.totalorder %s13, 0
      %p101 = por %p99, %p100
      %p102 = scmp.ne.s32.totalorder %s91, %s94
      %p103 = scmp.eq.s32.totalorder %s18, 3
      %p104 = por %p102, %p103
      %p105 = scmp.ne.s32.totalorder %s94, %s95
      %p106 = scmp.eq.s32.totalorder %s18, 0
      %p107 = por %p105, %p106
      %p108 = scmp.ne.s32.totalorder %s94, %s95
      %p109 = scmp.eq.s32.totalorder %s19, 3
      %p110 = por %p108, %p109
      %p112 = scmp.ne.s32.totalorder %s95, %s111
      %p113 = scmp.eq.s32.totalorder %s19, 0
      %p114 = por %p112, %p113
      %p115 = scmp.le.s32.totalorder 1, %s13
      %p116 = scmp.lt.s32.totalorder %s13, 5
      %p117 = pnand %p115, %p116
      %p118 = pneg %p117
      // Predicated region
      $region9: #{amlp_forward_stacked.1} parent=5 // pred_check
        _
      $region10: #{amlp_forward_stacked.1} parent=5 // pred_check_branch
        %120 = sbr.rel (%p117) target = $region12
      $region11: #{amlp_forward_stacked.1} parent=5 // pred_region
        %s121 = ssub.s32 %s13, 1
        // Predicated region
        $region13: #{amlp_forward_stacked.1} parent=11 // pred_check
          %p122 = pneg %p60
        $region14: #{amlp_forward_stacked.1} parent=11 // pred_check_branch
          %124 = sbr.rel (%p122) target = $region16
        $region15: #{amlp_forward_stacked.1} parent=11 // pred_region
          %126 = vsyncadd [#allocation3], 0
          %s127 = sshll.u32 %s1, 4
          %s128 = int_to_ptr.hbm [resolvable:$true] %s127
          %s129 = sshll.u32 [#allocation2], 4
          %s130 = int_to_ptr.vmem [resolvable:$true] %s129
          %135 = dma.hbm_to_vmem [thread:$0]  %s128, 2304, %s130, [#allocation3], 192, 192, 12
        $region16: #{amlp_forward_stacked.1} parent=11 // pred_fallthru
          _
        // Predicated region
        $region17: #{amlp_forward_stacked.1} parent=11 // pred_check
          %p136 = pneg %p81
        $region18: #{amlp_forward_stacked.1} parent=11 // pred_check_branch
          %138 = sbr.rel (%p136) target = $region20
        $region19: #{amlp_forward_stacked.1} parent=11 // pred_region
          _
        $region20: #{amlp_forward_stacked.1} parent=11 // pred_fallthru
          _
      $region12: #{amlp_forward_stacked.1} parent=5 // pred_fallthru
        _
      %p139 = scmp.lt.s32.totalorder %s13, 4
      // Predicated region
      $region21: #{amlp_forward_stacked.1} parent=5 // pred_check
        %p140 = pneg %p139
      $region22: #{amlp_forward_stacked.1} parent=5 // pred_check_branch
        %142 = sbr.rel (%p140) target = $region24
      $region23: #{amlp_forward_stacked.1} parent=5 // pred_region
        // Predicated region
        $region25: #{amlp_forward_stacked.1} parent=23 // pred_check
          %p143 = pneg %p33
        $region26: #{amlp_forward_stacked.1} parent=23 // pred_check_branch
          %145 = sbr.rel (%p143) target = $region28
        $region27: #{amlp_forward_stacked.1} parent=23 // pred_region
          %p146 = scmp.lt.s32.totalorder %s13, 3
          %s147 = scalar_select %p146, %s13, 3
          %s148 = smul.addr %s147, 4
          %s149 = scalar_lea.vmem %s0, %s148
        $region28: #{amlp_forward_stacked.1} parent=23 // pred_fallthru
          _
      $region24: #{amlp_forward_stacked.1} parent=5 // pred_fallthru
        _
      %p150 = scmp.le.s32.totalorder 1, %s13
      %p151 = scmp.lt.s32.totalorder %s13, 5
      %p152 = pnand %p150, %p151
      %p153 = pneg %p152
      // Predicated region
      $region29: #{amlp_forward_stacked.1} parent=5 // pred_check
        _
      $region30: #{amlp_forward_stacked.1} parent=5 // pred_check_branch
        %155 = sbr.rel (%p152) target = $region32
      $region31: #{amlp_forward_stacked.1} parent=5 // pred_region
        %s156 = ssub.s32 %s13, 1
        // Predicated region
        $region33: #{amlp_forward_stacked.1} parent=31 // pred_check
          %p157 = pneg %p60
        $region34: #{amlp_forward_stacked.1} parent=31 // pred_check_branch
          %159 = sbr.rel (%p157) target = $region36
        $region35: #{amlp_forward_stacked.1} parent=31 // pred_region
          %161 = dma.done [#allocation3], 2304
        $region36: #{amlp_forward_stacked.1} parent=31 // pred_fallthru
          _
        %p162 = scmp.lt.s32.totalorder %s18, 3
        %s163 = scalar_select %p162, %s18, 3
        %s164 = smul.addr %s163, 4
        %s165 = scalar_lea.vmem %s0, %s164
        %p166 = pneg %p39
        %p167 = pneg %p36
        %p168 = pneg %p60
        %p169 = pneg %p57
        %p170 = pneg %p81
        %p171 = pneg %p78
        %p172 = pneg %p107
        %p173 = pneg %p104
        %s174 = sand.u32 %s94, 1
        %s175 = scalar_lea.sflag [#allocation4], %s174
        %s176 = sand.u32 %s94, 1
        %s177 = smul.addr %s176, 8
        %s178 = scalar_lea.vmem [#allocation5], %s177
        %p179 = scmp.lt.s32.totalorder %s18, 3
        %s180 = scalar_select %p179, %s18, 3
        %s181 = smul.addr %s180, 4
        %s182 = scalar_lea.vmem %s0, %s181
        %v184 = vld [vmem:[%s182] sm:$0xf]
        %v185 = vld [vmem:[#allocation2] sm:$0xff]
        %v186 = vld [vmem:[#allocation2 + $0x8] sm:$0xf]
        %v187 = vld [vmem:[#allocation2 + $0xc] sm:$0xff]
        %v188 = vld [vmem:[#allocation2 + $0x14] sm:$0xf]
        %v189 = vld [vmem:[#allocation2 + $0x18] sm:$0xff]
        %v190 = vld [vmem:[#allocation2 + $0x20] sm:$0xf]
        %v191 = vld [vmem:[#allocation2 + $0x24] sm:$0xff]
        %v192 = vld [vmem:[#allocation2 + $0x2c] sm:$0xf]
        %v193 = vld [vmem:[#allocation2 + $0x30] sm:$0xff]
        %v194 = vld [vmem:[#allocation2 + $0x38] sm:$0xf]
        %v195 = vld [vmem:[#allocation2 + $0x3c] sm:$0xff]
        %v196 = vld [vmem:[#allocation2 + $0x44] sm:$0xf]
        %v197 = vld [vmem:[#allocation2 + $0x48] sm:$0xff]
        %v198 = vld [vmem:[#allocation2 + $0x50] sm:$0xf]
        %v199 = vld [vmem:[#allocation2 + $0x54] sm:$0xff]
        %v200 = vld [vmem:[#allocation2 + $0x5c] sm:$0xf]
        %v201 = vld [vmem:[#allocation2 + $0x60] sm:$0xff]
        %v202 = vld [vmem:[#allocation2 + $0x68] sm:$0xf]
        %v203 = vld [vmem:[#allocation2 + $0x6c] sm:$0xff]
        %v204 = vld [vmem:[#allocation2 + $0x74] sm:$0xf]
        %v205 = vld [vmem:[#allocation2 + $0x78] sm:$0xff]
        %v206 = vld [vmem:[#allocation2 + $0x80] sm:$0xf]
        %v207 = vld [vmem:[#allocation2 + $0x84] sm:$0xff]
        %v208 = vld [vmem:[#allocation2 + $0x8c] sm:$0xf]
        %v209 = vld [vmem:[%s2] sm:$0x7]
        %v211 = vperm.slane %v209, 0
        %v212 = vperm.slane %v209, 1
        %v213 = vperm.slane %v209, 2
        %v241 = vunpack.c.l.b16 %v185
        %v242 = vunpack.c.h.b16 %v185
        %v243 = vunpack.c.l.b16 %v186
        %v244 = vunpack.c.l.b16 %v187
        %v245 = vunpack.c.h.b16 %v187
        %v246 = vunpack.c.l.b16 %v188
        %v247 = vunpack.c.l.b16 %v189
        %v248 = vunpack.c.h.b16 %v189
        %v249 = vunpack.c.l.b16 %v190
        %v250 = vunpack.c.l.b16 %v191
        %v251 = vunpack.c.h.b16 %v191
        %v252 = vunpack.c.l.b16 %v192
        %v253 = vunpack.c.l.b16 %v193
        %v254 = vunpack.c.h.b16 %v193
        %v255 = vunpack.c.l.b16 %v194
        %v256 = vunpack.c.l.b16 %v195
        %v257 = vunpack.c.h.b16 %v195
        %v258 = vunpack.c.l.b16 %v196
        %v259 = vunpack.c.l.b16 %v197
        %v260 = vunpack.c.h.b16 %v197
        %v261 = vunpack.c.l.b16 %v198
        %v262 = vunpack.c.l.b16 %v199
        %v263 = vunpack.c.h.b16 %v199
        %v264 = vunpack.c.l.b16 %v200
        %v265 = vunpack.c.l.b16 %v201
        %v266 = vunpack.c.h.b16 %v201
        %v267 = vunpack.c.l.b16 %v202
        %v268 = vunpack.c.l.b16 %v203
        %v269 = vunpack.c.h.b16 %v203
        %v270 = vunpack.c.l.b16 %v204
        %v271 = vunpack.c.l.b16 %v205
        %v272 = vunpack.c.h.b16 %v205
        %v273 = vunpack.c.l.b16 %v206
        %v274 = vunpack.c.l.b16 %v207
        %v275 = vunpack.c.h.b16 %v207
        %v276 = vunpack.c.l.b16 %v208
        %v277 = vpack.c.b16 %v244, %v241
        %v278 = vpack.c.b16 %v245, %v242
        %v279 = vpack.c.b16 %v246, %v243
        %v280 = vpack.c.b16 %v250, %v247
        %v281 = vpack.c.b16 %v251, %v248
        %v282 = vpack.c.b16 %v252, %v249
        %v283 = vpack.c.b16 %v256, %v253
        %v284 = vpack.c.b16 %v257, %v254
        %v285 = vpack.c.b16 %v258, %v255
        %v286 = vpack.c.b16 %v262, %v259
        %v287 = vpack.c.b16 %v263, %v260
        %v288 = vpack.c.b16 %v264, %v261
        %v289 = vpack.c.b16 %v268, %v265
        %v290 = vpack.c.b16 %v269, %v266
        %v291 = vpack.c.b16 %v270, %v267
        %v292 = vpack.c.b16 %v274, %v271
        %v293 = vpack.c.b16 %v275, %v272
        %v294 = vpack.c.b16 %v276, %v273
        %vm313 = vcmask 785408
        %v315 = vsel %vm313, %v184, 0
        %317 = vmatpush.bf16.msra.mxu0 0
        %318 = vmatpush.bf16.msra.mxu0 0
        %319 = vmatpush.bf16.msra.mxu0 %v292
        %320 = vmatpush.bf16.msra.mxu0 %v289
        %321 = vmatpush.bf16.msra.mxu0 %v286
        %322 = vmatpush.bf16.msra.mxu0 %v283
        %323 = vmatpush.bf16.msra.mxu0 %v280
        %324 = vmatpush.bf16.msra.mxu0 %v277
        %325 = vmatmul.bf16.gmra.mxu0 %v315
        %v326 = vpop.f32.mrf.mxu0
        %v327 = vadd.f32 %v211, %v326
        %v328 = vpop.f32.mrf.mxu0
        %329 = vdwg.mxu0
        %330 = vmatpush.bf16.msra.mxu0 0
        %331 = vmatpush.bf16.msra.mxu0 0
        %332 = vmatpush.bf16.msra.mxu0 %v293
        %333 = vmatpush.bf16.msra.mxu0 %v290
        %334 = vmatpush.bf16.msra.mxu0 %v287
        %335 = vmatpush.bf16.msra.mxu0 %v284
        %336 = vmatpush.bf16.msra.mxu0 %v281
        %337 = vmatpush.bf16.msra.mxu0 %v278
        %338 = vmatmul.bf16.gmra.mxu0 %v315
        %v339 = vpop.f32.mrf.mxu0
        %v340 = vadd.f32 %v212, %v339
        %v341 = vpop.f32.mrf.mxu0
        %342 = vdwg.mxu0
        %343 = vmatpush.bf16.msra.mxu0 0
        %344 = vmatpush.bf16.msra.mxu0 0
        %345 = vmatpush.bf16.msra.mxu0 %v294
        %346 = vmatpush.bf16.msra.mxu0 %v291
        %347 = vmatpush.bf16.msra.mxu0 %v288
        %348 = vmatpush.bf16.msra.mxu0 %v285
        %349 = vmatpush.bf16.msra.mxu0 %v282
        %350 = vmatpush.bf16.msra.mxu0 %v279
        %351 = vmatmul.bf16.gmra.mxu0 %v315
        %v352 = vpop.f32.mrf.mxu0
        %v353 = vadd.f32 %v213, %v352
        %v354 = vpop.f32.mrf.mxu0
        %355 = vdwg.mxu0
        %v356 = vmul.f32 %v327, %v327
        %v357 = vmul.f32 %v340, %v340
        %v358 = vmul.f32 %v353, %v353
        %vm359 = vcmask 1048320
        %v360 = vsel %vm359, %v356, 0.0
        %v361 = vrot.slane %v360, 4
        %v362 = vadd.f32 %v360, %v361
        %v363 = vrot.slane %v362, 2
        %v364 = vadd.f32 %v362, %v363
        %v365 = vrot.slane %v364, 1
        %v366 = vadd.f32 %v364, %v365
        %v367 = vrot.slane %v357, 4
        %v368 = vadd.f32 %v357, %v367
        %v369 = vrot.slane %v368, 2
        %v370 = vadd.f32 %v368, %v369
        %v371 = vrot.slane %v370, 1
        %v372 = vadd.f32 %v370, %v371
        %vm373 = vcmask 261120
        %v374 = vsel %vm373, %v358, 0.0
        %v375 = vrot.slane %v374, 4
        %v376 = vadd.f32 %v374, %v375
        %v377 = vrot.slane %v376, 2
        %v378 = vadd.f32 %v376, %v377
        %v379 = vrot.slane %v378, 1
        %v380 = vadd.f32 %v378, %v379
        %383 = vrot.lane.b32.xlu0 %v366, 32
        %v384 = vpop.permute.xlu0 %383
        %385 = vrot.lane.b32.xlu0 %v372, 32
        %v386 = vpop.permute.xlu0 %385
        %v387 = vsel %vm373, %v384, %v386
        %vm389 = vcmask 523264
        %v390 = vsel %vm389, %v387, 0.0
        %391 = vadd.xlane.f32.xlu0 %v390
        %v392 = vpop.xlane.xlu0 %391
        %v393 = vrsqrt.pop %v392
        %v394 = vmul.f32 %v393, %v392
        %v395 = vmul.f32 %v394, %v393
        %v396 = vmul.f32 0.5, %v395
        %v397 = vsub.f32 1.5, %v396
        %v398 = vmul.f32 %v393, %v397
        %v399 = vmul.f32 %v392, %v398
        %vm400 = vcmp.eq.f32.partialorder %v392, inf
        %v401 = vsel %vm400, %v392, %v399
        %vm402 = vcmp.eq.f32.partialorder %v392, 0.0
        %v403 = vand.u32 %v392, 2147483648
        %v404 = vsel %vm402, %v403, %v401
        %405 = vrot.lane.b32.xlu0 %v372, 96
        %v406 = vpop.permute.xlu0 %405
        %v408 = vsel %vm389, %v406, 0.0
        %409 = vadd.xlane.f32.xlu0 %v408
        %v410 = vpop.xlane.xlu0 %409
        %v411 = vrsqrt.pop %v410
        %v412 = vmul.f32 %v411, %v410
        %v413 = vmul.f32 %v412, %v411
        %v414 = vmul.f32 0.5, %v413
        %v415 = vsub.f32 1.5, %v414
        %v416 = vmul.f32 %v411, %v415
        %v417 = vmul.f32 %v410, %v416
        %vm418 = vcmp.eq.f32.partialorder %v410, inf
        %v419 = vsel %vm418, %v410, %v417
        %vm420 = vcmp.eq.f32.partialorder %v410, 0.0
        %v421 = vand.u32 %v410, 2147483648
        %v422 = vsel %vm420, %v421, %v419
        %424 = vrot.lane.b32.xlu0 %v380, 32
        %v425 = vpop.permute.xlu0 %424
        %v426 = vsel %vm373, %v386, %v425
        %v428 = vsel %vm389, %v426, 0.0
        %429 = vadd.xlane.f32.xlu0 %v428
        %v430 = vpop.xlane.xlu0 %429
        %v431 = vrsqrt.pop %v430
        %v432 = vmul.f32 %v431, %v430
        %v433 = vmul.f32 %v432, %v431
        %v434 = vmul.f32 0.5, %v433
        %v435 = vsub.f32 1.5, %v434
        %v436 = vmul.f32 %v431, %v435
        %v437 = vmul.f32 %v430, %v436
        %vm438 = vcmp.eq.f32.partialorder %v430, inf
        %v439 = vsel %vm438, %v430, %v437
        %vm440 = vcmp.eq.f32.partialorder %v430, 0.0
        %v441 = vand.u32 %v430, 2147483648
        %v442 = vsel %vm440, %v441, %v439
        %v443 = vadd.f32 %v404, %v422
        %v444 = vadd.f32 %v443, %v442
        %v445 = vrcp.pop %v444
        %v446 = vmul.f32 %v444, %v445
        %v447 = vsub.f32 1.0, %v446
        %v448 = vmul.f32 %v445, %v447
        %v449 = vadd.f32 %v445, %v448
        %vm450 = vweird.f32 %v444
        %vm451 = vweird.f32 %v445
        %vm452 = vmor %vm450, %vm451
        %v453 = vsel %vm452, %v445, %v449
        %v454 = vand.u32 2147483647, %v444
        %vm455 = vcmp.eq.f32.partialorder %v454, 8.507059e+37
        %v456 = vand.u32 %v444, 2147483648
        %v457 = vor.u32 1.1754944e-38, %v456
        %v458 = vsel %vm455, %v457, %v453
        %v459 = vmul.f32 %v404, %v458
        %v460 = vmul.f32 %v459, %v327
        %v461 = vmul.f32 %v422, %v458
        %v462 = vmul.f32 %v461, %v327
        %464 = vrot.lane.b32.xlu0 %v462, 96
        %v465 = vpop.permute.xlu0 %464
        %v467 = vadd.f32 %v460, %v465
        %v468 = vmul.f32 %v442, %v458
        %v469 = vmul.f32 %v468, %v327
        %471 = vrot.lane.b32.xlu0 %v469, 64
        %v472 = vpop.permute.xlu0 %471
        %v474 = vadd.f32 %v467, %v472
        %v475 = vmul.f32 %v474, %v474
        %v476 = vsel %vm373, %v475, 0.0
        %477 = vadd.xlane.f32.xlu0 %v476
        %v478 = vpop.xlane.xlu0 %477
        %v479 = vmax.f32 %v478, 1e-24
        %v480 = vrsqrt.pop %v479
        %v481 = vmul.f32 %v480, %v479
        %v482 = vmul.f32 %v481, %v480
        %v483 = vmul.f32 0.5, %v482
        %v484 = vsub.f32 1.5, %v483
        %v485 = vmul.f32 %v480, %v484
        %vm486 = vweird.f32 %v479
        %vm487 = vweird.f32 %v480
        %vm488 = vmor %vm486, %vm487
        %v489 = vsel %vm488, %v480, %v485
        %v490 = vmul.f32 %v474, %v489
        %491 = vst.msk [vmem:[%s178] sm:$0xff] %vm373, %v490
        %s492 = sand.u32 %s94, 1
        %s493 = scalar_lea.sflag [#allocation4], %s492
        %s494 = sand.u32 %s94, 1
        %s495 = smul.addr %s494, 8
        %s496 = scalar_lea.vmem [#allocation5], %s495
        // Predicated region
        $region37: #{amlp_forward_stacked.1} parent=31 // pred_check
          %p497 = pneg %p104
        $region38: #{amlp_forward_stacked.1} parent=31 // pred_check_branch
          %499 = sbr.rel (%p497) target = $region40
        $region39: #{amlp_forward_stacked.1} parent=31 // pred_region
          %501 = vsyncadd %s493, 0
          %s502 = smul.addr %s18, 8
          %s503 = scalar_lea.hbm %s3, %s502
          %s505 = sshll.u32 %s496, 4
          %s506 = int_to_ptr.vmem [resolvable:$true] %s505
          %s507 = sshll.u32 %s503, 4
          %s508 = int_to_ptr.hbm [resolvable:$true] %s507
          %510 = dma.vmem_to_hbm [thread:$0]  %s506, 128, %s508, %s493
        $region40: #{amlp_forward_stacked.1} parent=31 // pred_fallthru
          _
      $region32: #{amlp_forward_stacked.1} parent=5 // pred_fallthru
        _
      %p511 = scmp.le.s32.totalorder 2, %s13
      // Predicated region
      $region41: #{amlp_forward_stacked.1} parent=5 // pred_check
        %p512 = pneg %p511
      $region42: #{amlp_forward_stacked.1} parent=5 // pred_check_branch
        %514 = sbr.rel (%p512) target = $region44
      $region43: #{amlp_forward_stacked.1} parent=5 // pred_region
        %s515 = ssub.s32 %s13, 2
        // Predicated region
        $region45: #{amlp_forward_stacked.1} parent=43 // pred_check
          %p516 = pneg %p110
        $region46: #{amlp_forward_stacked.1} parent=43 // pred_check_branch
          %518 = sbr.rel (%p516) target = $region48
        $region47: #{amlp_forward_stacked.1} parent=43 // pred_region
          %s519 = sand.u32 %s95, 1
          %s520 = scalar_lea.sflag [#allocation4], %s519
          %s521 = sand.u32 %s95, 1
          %s522 = smul.addr %s521, 8
          %s523 = scalar_lea.vmem [#allocation5], %s522
          %525 = dma.done %s520, 128
        $region48: #{amlp_forward_stacked.1} parent=43 // pred_fallthru
          _
      $region44: #{amlp_forward_stacked.1} parent=5 // pred_fallthru
        _
    $region6: #{amlp_forward_stacked.1} parent=1 // loop_footer
      %s17 = sadd.s32 1, %s13
    $region7: #{amlp_forward_stacked.1} parent=1 // loop_footer_branch
      %12 = sbr.rel target = $region3
    $region8: #{amlp_forward_stacked.1} parent=1 // loop_exit
      _
    %526 = vsyncpa [#allocation3], 1
    %s527 = scalar_lea.sflag [#allocation3], 1
    %528 = vsyncpa %s527, 1
    %529 = vsyncpa [#allocation4], 1
    %s530 = scalar_lea.sflag [#allocation4], 1
    %531 = vsyncpa %s530, 1

</llo_original>
